<compile_context>
chip_gen: v7x
topology: tpu7x:2x2x1
jax: 0.10.0
libtpu: 0.0.40
codegen_flags: <defaults>
</compile_context>

<pallas_src>
import functools

import jax
import jax.numpy as jnp
from jax.experimental import pallas as pl
from jax.experimental.pallas import tpu as pltpu


_LANE = 128        # lane width
_TM_CAP = 256      # max batch-tile rows (matches 256-wide MXU on v6e/v7x)
_GRAN = 16         # sublane granularity for batch tiles (bf16-packing friendly)


def _round_up(x, m):
    return (x + m - 1) // m * m


def _pad2d(a, rows, cols):
    return jnp.pad(a, ((0, rows - a.shape[0]), (0, cols - a.shape[1])))


def _vmem_limit_bytes():
    """Generation-aware scoped-VMEM budget (conservative 3/4 of physical, <=64MiB)."""
    try:
        phys = int(pltpu.get_tpu_info().vmem_capacity_bytes)
    except Exception:
        phys = 64 << 20            # assume the smallest (v7x) if query fails
    return int(min(phys * 3 // 4, 64 << 20))


# ----------------------------- fused kernel -----------------------------

def _mlp_fused_kernel(*refs, num_hidden, hid_p, out_p, apply_sigmoid):
    """Whole MLP forward for one batch tile.

    refs layout (inputs then outputs):
      x(bf16), w_h0..w_h{n-1}(bf16), w_out(bf16), shifts(f32, (n+1, C)),
      out(f32), h_0..h_{n-1}(f32)
    Bias + eval-mode BatchNorm are pre-folded into (w_h, shifts) wrapper-side.
    """
    x_ref = refs[0]
    w_refs = refs[1:1 + num_hidden]
    w_out_ref = refs[1 + num_hidden]
    shifts_ref = refs[2 + num_hidden]
    out_ref = refs[3 + num_hidden]
    h_refs = refs[4 + num_hidden:4 + 2 * num_hidden]

    emb = x_ref[...]                                    # bf16 tile
    for l in range(num_hidden):
        z = jnp.dot(emb, w_refs[l][...],                # MXU: bf16 in, f32 acc
                    preferred_element_type=jnp.float32)
        z = jnp.maximum(z + shifts_ref[l:l + 1, :hid_p], 0.0)   # Linear+BN fold, ReLU
        h_refs[l][...] = z.astype(h_refs[l].dtype)      # Dropout = identity (eval)
        emb = z.astype(emb.dtype)                       # back to bf16 for next MXU pass

    z = jnp.dot(emb, w_out_ref[...], preferred_element_type=jnp.float32)
    z = z + shifts_ref[num_hidden:num_hidden + 1, :out_p]
    if apply_sigmoid:
        z = jax.nn.sigmoid(z)                           # EUP slot, stays fused
    out_ref[...] = z.astype(out_ref.dtype)


# ----------------------------- Parameter setup -----------------------------

def init_mlp_params(key, in_dim, hidden_dim, out_dim, num_hidden_layers, eps=1e-5):
    """Parameters matching the PyTorch module's shapes.

    Weights stored as [in_features, out_features] (transpose of nn.Linear).
    BatchNorm stats randomized (non-trivial) to exercise the eval-mode fold.
    """
    params = {"hidden": [], "out": None, "eps": eps}
    dims_in = [in_dim] + [hidden_dim] * (num_hidden_layers - 1)
    for d_in in dims_in:
        key, k_w, k_b, k_g, k_be, k_m, k_v = jax.random.split(key, 7)
        bound = 1.0 / jnp.sqrt(jnp.float32(d_in))
        w = jax.random.uniform(k_w, (d_in, hidden_dim), jnp.float32, -bound, bound)
        b = jax.random.uniform(k_b, (hidden_dim,), jnp.float32, -bound, bound)
        gamma = 1.0 + 0.1 * jax.random.normal(k_g, (hidden_dim,), jnp.float32)
        beta = 0.1 * jax.random.normal(k_be, (hidden_dim,), jnp.float32)
        running_mean = 0.1 * jax.random.normal(k_m, (hidden_dim,), jnp.float32)
        running_var = jax.random.uniform(k_v, (hidden_dim,), jnp.float32, 0.5, 1.5)
        params["hidden"].append({
            "w": w, "b": b, "gamma": gamma, "beta": beta,
            "mean": running_mean, "var": running_var,
        })
    key, k_w, k_b = jax.random.split(key, 3)
    bound = 1.0 / jnp.sqrt(jnp.float32(hidden_dim))
    params["out"] = {
        "w": jax.random.uniform(k_w, (hidden_dim, out_dim), jnp.float32, -bound, bound),
        "b": jax.random.uniform(k_b, (out_dim,), jnp.float32, -bound, bound),
    }
    return params


def prepare_mlp_params(params, *, compute_dtype=jnp.bfloat16):
    """One-time (hoisted out of the forward hot path) fold + pad + cast.

    Eval-mode BN folded into the Linear:
      relu((x@W + b)*scale + shift) == relu(x@(W*scale) + (b*scale + shift)).
    Weights are zero-padded to lane-dense shapes and cast to `compute_dtype`
    for the MXU; shifts/bias stay f32 for the epilogue.
    """
    eps = params["eps"]
    hidden = params["hidden"]
    num_hidden = len(hidden)
    K = hidden[0]["w"].shape[0]
    Hdim = hidden[0]["w"].shape[1]
    Odim = params["out"]["w"].shape[1]

    Kp = _round_up(K, _LANE)
    Hp = _round_up(Hdim, _LANE)
    Op = _round_up(Odim, _LANE)
    Cp = max(Hp, Op)

    w_hidden = []
    shift_rows = []
    k_in, k_in_p = K, Kp
    for layer in hidden:
        scale = layer["gamma"] / jnp.sqrt(layer["var"] + eps)
        shift = layer["beta"] - layer["mean"] * scale
        w_f = layer["w"] * scale[None, :]
        s_f = layer["b"] * scale + shift
        w_hidden.append(_pad2d(w_f, k_in_p, Hp).astype(compute_dtype))
        shift_rows.append(_pad2d(s_f.reshape(1, -1), 1, Cp))
        k_in, k_in_p = Hdim, Hp

    w_out = _pad2d(params["out"]["w"], Hp, Op).astype(compute_dtype)
    shift_rows.append(_pad2d(params["out"]["b"].reshape(1, -1), 1, Cp))
    shifts = jnp.concatenate(shift_rows, axis=0).astype(jnp.float32)  # (n+1, Cp)

    prepared = {
        "w_hidden": [jax.device_put(w) for w in w_hidden],
        "w_out": jax.device_put(w_out),
        "shifts": jax.device_put(shifts),
        "compute_dtype": compute_dtype,
        "dims": {"K": K, "H": Hdim, "O": Odim, "Kp": Kp, "Hp": Hp, "Op": Op, "Cp": Cp},
        "num_hidden": num_hidden,
    }
    return prepared


# ----------------------------- Forward (wrapper) -----------------------------

def mlp_forward(prepared, inputs, *, act_out=False):
    dims = prepared["dims"]
    K, Hdim, Odim = dims["K"], dims["H"], dims["O"]
    Kp, Hp, Op = dims["Kp"], dims["Hp"], dims["Op"]
    num_hidden = prepared["num_hidden"]
    cdt = prepared["compute_dtype"]

    B = inputs.shape[0]
    x = inputs.reshape(B, -1)                      # nn.Flatten (row-major NCHW)
    assert x.shape[1] == K, f"expected flattened dim {K}, got {x.shape[1]}"

    # Batch tiling: big lane/sublane-dense tiles, and >=2 tiles for medium/large
    # batches so "parallel" can shard across v7x's two TensorCores.
    tm = min(_TM_CAP, _round_up(B, _GRAN))
    Bp = _round_up(B, tm)
    if Bp // tm == 1 and Bp >= 2 * _GRAN:
        tm = _round_up(Bp // 2, _GRAN)
        Bp = _round_up(B, tm)

    x_p = _pad2d(x, Bp, Kp).astype(cdt)            # zero-pad -> exact results, bf16 stream

    flat_inputs = [x_p] + list(prepared["w_hidden"]) + [prepared["w_out"], prepared["shifts"]]

    in_specs = [pl.BlockSpec((tm, Kp), lambda i: (i, 0))]
    for w in prepared["w_hidden"]:
        in_specs.append(pl.BlockSpec(w.shape, lambda i: (0, 0)))       # resident weights
    in_specs.append(pl.BlockSpec(prepared["w_out"].shape, lambda i: (0, 0)))
    in_specs.append(pl.BlockSpec(prepared["shifts"].shape, lambda i: (0, 0)))

    out_shapes = (jax.ShapeDtypeStruct((Bp, Op), jnp.float32),) + \
                 tuple(jax.ShapeDtypeStruct((Bp, Hp), jnp.float32)
                       for _ in range(num_hidden))
    out_specs = (pl.BlockSpec((tm, Op), lambda i: (i, 0)),) + \
                tuple(pl.BlockSpec((tm, Hp), lambda i: (i, 0))
                      for _ in range(num_hidden))

    flops = 2 * Bp * (Kp * Hp + (num_hidden - 1) * Hp * Hp + Hp * Op)
    out_bytes = 4 * (Bp * Op + num_hidden * Bp * Hp)
    in_bytes = sum(int(a.size) * a.dtype.itemsize for a in flat_inputs)
    cost = pl.CostEstimate(flops=flops,
                           transcendentals=(Bp * Op if act_out else 0),
                           bytes_accessed=in_bytes + out_bytes)

    kernel = functools.partial(_mlp_fused_kernel,
                               num_hidden=num_hidden,
                               hid_p=Hp, out_p=Op,
                               apply_sigmoid=act_out)

    outs = pl.pallas_call(
        kernel,
        out_shape=out_shapes,
        grid_spec=pltpu.PrefetchScalarGridSpec(
            num_scalar_prefetch=0,
            grid=(Bp // tm,),
            in_specs=in_specs,
            out_specs=out_specs,
        ),
        compiler_params=pltpu.CompilerParams(
            dimension_semantics=("parallel",),      # shard batch tiles across TCs
            vmem_limit_bytes=_vmem_limit_bytes(),   # generation-aware budget
        ),
        cost_estimate=cost,
    )(*flat_inputs)

    out = outs[0][:B, :Odim]
    intermediates = [h[:B, :Hdim] for h in outs[1:]]
    return (out, *intermediates)


# ----------------------------- References -----------------------------

def mlp_reference_f32(params, inputs, *, act_out=False):
    """Pure-JAX eval-mode reference, full f32 (matches the PyTorch module)."""
    B = inputs.shape[0]
    eps = params["eps"]
    emb = inputs.reshape(B, -1)
    intermediates = []
    for layer in params["hidden"]:
        z = emb @ layer["w"] + layer["b"]
        z = (z - layer["mean"]) / jnp.sqrt(layer["var"] + eps)
        z = z * layer["gamma"] + layer["beta"]
        emb = jnp.maximum(z, 0.0)
        intermediates.append(emb)
    out = emb @ params["out"]["w"] + params["out"]["b"]
    if act_out:
        out = jax.nn.sigmoid(out)
    return (out, *intermediates)


def mlp_reference_bf16(params, inputs, *, act_out=False):
    """Pure-JAX reference emulating the kernel's bf16-matmul / f32-epilogue path."""
    B = inputs.shape[0]
    eps = params["eps"]
    emb = inputs.reshape(B, -1).astype(jnp.bfloat16)
    intermediates = []
    for layer in params["hidden"]:
        scale = layer["gamma"] / jnp.sqrt(layer["var"] + eps)
        shift = layer["beta"] - layer["mean"] * scale
        w_f = (layer["w"] * scale[None, :]).astype(jnp.bfloat16)
        s_f = layer["b"] * scale + shift
        z = jnp.dot(emb, w_f, preferred_element_type=jnp.float32) + s_f
        z = jnp.maximum(z, 0.0)
        intermediates.append(z)
        emb = z.astype(jnp.bfloat16)
    out = jnp.dot(emb, params["out"]["w"].astype(jnp.bfloat16),
                  preferred_element_type=jnp.float32) + params["out"]["b"]
    if act_out:
        out = jax.nn.sigmoid(out)
    return (out, *intermediates)


# ----------------------------- Main -----------------------------

if __name__ == "__main__":
    key = jax.random.PRNGKey(0)
    k_x, k_p = jax.random.split(key)

    B, C, H, W = 2, 4, 16, 16
    hidden_dim = 32
    out_dim = 8
    num_hidden_layers = 3
    act_out = True

    x = jax.random.normal(k_x, (B, C, H, W), jnp.float32)
    params = init_mlp_params(k_p, C * H * W, hidden_dim, out_dim, num_hidden_layers)

    # One-time fold/pad/cast of the weights (hoisted out of the forward path).
    prepared = prepare_mlp_params(params)

    outs = mlp_forward(prepared, x, act_out=act_out)
    outs = jax.block_until_ready(outs)

    # Exact-path check (same bf16-matmul / f32-epilogue numerics as the kernel).
    refs_bf16 = mlp_reference_bf16(params, x, act_out=act_out)
    for o, r in zip(outs, refs_bf16):
        assert o.shape == r.shape, f"shape mismatch {o.shape} vs {r.shape}"
        assert jnp.allclose(o, r, atol=2e-3, rtol=2e-3), "mismatch vs bf16-path reference"

    # Semantic check vs the full-f32 module (looser tolerance: bf16 MXU inputs).
    refs_f32 = mlp_reference_f32(params, x, act_out=act_out)
    for o, r in zip(outs, refs_f32):
        assert o.shape == r.shape, f"shape mismatch {o.shape} vs {r.shape}"
        assert jnp.allclose(o, r, atol=3e-2, rtol=3e-2), "mismatch vs f32 reference"

    print("KERNEL_OK")
</pallas_src>

<mosaic_0001>
module attributes {stable_mosaic.version = 11 : i64} {
  func.func @_mlp_fused_kernel(%arg0: i32, %arg1: memref<16x1024xbf16, #tpu.memory_space<vmem>>, %arg2: memref<1024x128xbf16, #tpu.memory_space<vmem>>, %arg3: memref<128x128xbf16, #tpu.memory_space<vmem>>, %arg4: memref<128x128xbf16, #tpu.memory_space<vmem>>, %arg5: memref<128x128xbf16, #tpu.memory_space<vmem>>, %arg6: memref<4x128xf32, #tpu.memory_space<vmem>>, %arg7: memref<16x128xf32, #tpu.memory_space<vmem>>, %arg8: memref<16x128xf32, #tpu.memory_space<vmem>>, %arg9: memref<16x128xf32, #tpu.memory_space<vmem>>, %arg10: memref<16x128xf32, #tpu.memory_space<vmem>>) attributes {dimension_semantics = [#tpu.dimension_semantics<parallel>], iteration_bounds = array<i64: 1>, scalar_prefetch = 0 : i64, scratch_operands = 0 : i64, tpu.core_type = #tpu.core_type<tc>, window_params = [{transform_indices = @transform_0, window_bounds = array<i64: 16, 1024>}, {pipeline_mode = #tpu.pipeline_mode<synchronous>, transform_indices = @transform_1, window_bounds = array<i64: 1024, 128>}, {pipeline_mode = #tpu.pipeline_mode<synchronous>, transform_indices = @transform_2, window_bounds = array<i64: 128, 128>}, {pipeline_mode = #tpu.pipeline_mode<synchronous>, transform_indices = @transform_3, window_bounds = array<i64: 128, 128>}, {pipeline_mode = #tpu.pipeline_mode<synchronous>, transform_indices = @transform_4, window_bounds = array<i64: 128, 128>}, {pipeline_mode = #tpu.pipeline_mode<synchronous>, transform_indices = @transform_5, window_bounds = array<i64: 4, 128>}, {transform_indices = @transform_6, window_bounds = array<i64: 16, 128>}, {transform_indices = @transform_7, window_bounds = array<i64: 16, 128>}, {transform_indices = @transform_8, window_bounds = array<i64: 16, 128>}, {transform_indices = @transform_9, window_bounds = array<i64: 16, 128>}]} {
    %c0 = arith.constant 0 : index
    %c0_0 = arith.constant 0 : index
    %0 = vector.load %arg1[%c0, %c0_0] : memref<16x1024xbf16, #tpu.memory_space<vmem>>, vector<16x1024xbf16>
    %c0_1 = arith.constant 0 : index
    %c0_2 = arith.constant 0 : index
    %1 = vector.load %arg2[%c0_1, %c0_2] : memref<1024x128xbf16, #tpu.memory_space<vmem>>, vector<1024x128xbf16>
    %cst = arith.constant dense<0.000000e+00> : vector<16x128xf32>
    %2 = tpu.matmul %0, %1, %cst {dimension_numbers = #tpu.dot_dimension_numbers<[1], [0], [0], [1], [0, 0, 1, 1], [], []>} : vector<16x1024xbf16>, vector<1024x128xbf16>, vector<16x128xf32> -> vector<16x128xf32>
    %c0_3 = arith.constant 0 : index
    %c0_4 = arith.constant 0 : index
    %3 = vector.load %arg6[%c0_3, %c0_4] : memref<4x128xf32, #tpu.memory_space<vmem>>, vector<1x128xf32>
    %4 = vector.broadcast %3 : vector<1x128xf32> to vector<16x128xf32>
    %5 = arith.addf %2, %4 : vector<16x128xf32>
    %cst_5 = arith.constant 0.000000e+00 : f32
    %6 = vector.broadcast %cst_5 : f32 to vector<16x128xf32>
    %7 = arith.maximumf %5, %6 : vector<16x128xf32>
    %c0_6 = arith.constant 0 : index
    %c0_7 = arith.constant 0 : index
    %8 = vector.load %arg8[%c0_6, %c0_7] : memref<16x128xf32, #tpu.memory_space<vmem>>, vector<16x128xf32>
    tpu.vector_store %arg8[%c0_6, %c0_7], %7 {strides = array<i32>} : memref<16x128xf32, #tpu.memory_space<vmem>>, vector<16x128xf32>,
    %9 = arith.truncf %7 : vector<16x128xf32> to vector<16x128xbf16>
    %c0_8 = arith.constant 0 : index
    %c0_9 = arith.constant 0 : index
    %10 = vector.load %arg3[%c0_8, %c0_9] : memref<128x128xbf16, #tpu.memory_space<vmem>>, vector<128x128xbf16>
    %cst_10 = arith.constant dense<0.000000e+00> : vector<16x128xf32>
    %11 = tpu.matmul %9, %10, %cst_10 {dimension_numbers = #tpu.dot_dimension_numbers<[1], [0], [0], [1], [0, 0, 1, 1], [], []>} : vector<16x128xbf16>, vector<128x128xbf16>, vector<16x128xf32> -> vector<16x128xf32>
    %c1 = arith.constant 1 : index
    %c0_11 = arith.constant 0 : index
    %12 = vector.load %arg6[%c1, %c0_11] : memref<4x128xf32, #tpu.memory_space<vmem>>, vector<1x128xf32>
    %13 = vector.broadcast %12 : vector<1x128xf32> to vector<16x128xf32>
    %14 = arith.addf %11, %13 : vector<16x128xf32>
    %cst_12 = arith.constant 0.000000e+00 : f32
    %15 = vector.broadcast %cst_12 : f32 to vector<16x128xf32>
    %16 = arith.maximumf %14, %15 : vector<16x128xf32>
    %c0_13 = arith.constant 0 : index
    %c0_14 = arith.constant 0 : index
    %17 = vector.load %arg9[%c0_13, %c0_14] : memref<16x128xf32, #tpu.memory_space<vmem>>, vector<16x128xf32>
    tpu.vector_store %arg9[%c0_13, %c0_14], %16 {strides = array<i32>} : memref<16x128xf32, #tpu.memory_space<vmem>>, vector<16x128xf32>,
    %18 = arith.truncf %16 : vector<16x128xf32> to vector<16x128xbf16>
    %c0_15 = arith.constant 0 : index
    %c0_16 = arith.constant 0 : index
    %19 = vector.load %arg4[%c0_15, %c0_16] : memref<128x128xbf16, #tpu.memory_space<vmem>>, vector<128x128xbf16>
    %cst_17 = arith.constant dense<0.000000e+00> : vector<16x128xf32>
    %20 = tpu.matmul %18, %19, %cst_17 {dimension_numbers = #tpu.dot_dimension_numbers<[1], [0], [0], [1], [0, 0, 1, 1], [], []>} : vector<16x128xbf16>, vector<128x128xbf16>, vector<16x128xf32> -> vector<16x128xf32>
    %c2 = arith.constant 2 : index
    %c0_18 = arith.constant 0 : index
    %21 = vector.load %arg6[%c2, %c0_18] : memref<4x128xf32, #tpu.memory_space<vmem>>, vector<1x128xf32>
    %22 = vector.broadcast %21 : vector<1x128xf32> to vector<16x128xf32>
    %23 = arith.addf %20, %22 : vector<16x128xf32>
    %cst_19 = arith.constant 0.000000e+00 : f32
    %24 = vector.broadcast %cst_19 : f32 to vector<16x128xf32>
    %25 = arith.maximumf %23, %24 : vector<16x128xf32>
    %c0_20 = arith.constant 0 : index
    %c0_21 = arith.constant 0 : index
    %26 = vector.load %arg10[%c0_20, %c0_21] : memref<16x128xf32, #tpu.memory_space<vmem>>, vector<16x128xf32>
    tpu.vector_store %arg10[%c0_20, %c0_21], %25 {strides = array<i32>} : memref<16x128xf32, #tpu.memory_space<vmem>>, vector<16x128xf32>,
    %27 = arith.truncf %25 : vector<16x128xf32> to vector<16x128xbf16>
    %c0_22 = arith.constant 0 : index
    %c0_23 = arith.constant 0 : index
    %28 = vector.load %arg5[%c0_22, %c0_23] : memref<128x128xbf16, #tpu.memory_space<vmem>>, vector<128x128xbf16>
    %cst_24 = arith.constant dense<0.000000e+00> : vector<16x128xf32>
    %29 = tpu.matmul %27, %28, %cst_24 {dimension_numbers = #tpu.dot_dimension_numbers<[1], [0], [0], [1], [0, 0, 1, 1], [], []>} : vector<16x128xbf16>, vector<128x128xbf16>, vector<16x128xf32> -> vector<16x128xf32>
    %c3 = arith.constant 3 : index
    %c0_25 = arith.constant 0 : index
    %30 = vector.load %arg6[%c3, %c0_25] : memref<4x128xf32, #tpu.memory_space<vmem>>, vector<1x128xf32>
    %31 = vector.broadcast %30 : vector<1x128xf32> to vector<16x128xf32>
    %32 = arith.addf %29, %31 : vector<16x128xf32>
    %33 = arith.negf %32 : vector<16x128xf32>
    %34 = math.exp %33 : vector<16x128xf32>
    %cst_26 = arith.constant 1.000000e+00 : f32
    %35 = vector.broadcast %cst_26 : f32 to vector<16x128xf32>
    %36 = arith.addf %35, %34 : vector<16x128xf32>
    %37 = arith.divf %35, %36 : vector<16x128xf32>
    %c0_27 = arith.constant 0 : index
    %c0_28 = arith.constant 0 : index
    %38 = vector.load %arg7[%c0_27, %c0_28] : memref<16x128xf32, #tpu.memory_space<vmem>>, vector<16x128xf32>
    tpu.vector_store %arg7[%c0_27, %c0_28], %37 {strides = array<i32>} : memref<16x128xf32, #tpu.memory_space<vmem>>, vector<16x128xf32>,
    return
  }
  func.func @transform_0(%arg0: i32) -> (i32, i32) {
    %c0_i32 = arith.constant 0 : i32
    %c0_i32_0 = arith.constant 0 : i32
    return %arg0, %c0_i32 : i32, i32
  }
  func.func @transform_1(%arg0: i32) -> (i32, i32) {
    %c0_i32 = arith.constant 0 : i32
    %c0_i32_0 = arith.constant 0 : i32
    %c0_i32_1 = arith.constant 0 : i32
    return %c0_i32, %c0_i32_0 : i32, i32
  }
  func.func @transform_2(%arg0: i32) -> (i32, i32) {
    %c0_i32 = arith.constant 0 : i32
    %c0_i32_0 = arith.constant 0 : i32
    %c0_i32_1 = arith.constant 0 : i32
    return %c0_i32, %c0_i32_0 : i32, i32
  }
  func.func @transform_3(%arg0: i32) -> (i32, i32) {
    %c0_i32 = arith.constant 0 : i32
    %c0_i32_0 = arith.constant 0 : i32
    %c0_i32_1 = arith.constant 0 : i32
    return %c0_i32, %c0_i32_0 : i32, i32
  }
  func.func @transform_4(%arg0: i32) -> (i32, i32) {
    %c0_i32 = arith.constant 0 : i32
    %c0_i32_0 = arith.constant 0 : i32
    %c0_i32_1 = arith.constant 0 : i32
    return %c0_i32, %c0_i32_0 : i32, i32
  }
  func.func @transform_5(%arg0: i32) -> (i32, i32) {
    %c0_i32 = arith.constant 0 : i32
    %c0_i32_0 = arith.constant 0 : i32
    %c0_i32_1 = arith.constant 0 : i32
    return %c0_i32, %c0_i32_0 : i32, i32
  }
  func.func @transform_6(%arg0: i32) -> (i32, i32) {
    %c0_i32 = arith.constant 0 : i32
    %c0_i32_0 = arith.constant 0 : i32
    return %arg0, %c0_i32 : i32, i32
  }
  func.func @transform_7(%arg0: i32) -> (i32, i32) {
    %c0_i32 = arith.constant 0 : i32
    %c0_i32_0 = arith.constant 0 : i32
    return %arg0, %c0_i32 : i32, i32
  }
  func.func @transform_8(%arg0: i32) -> (i32, i32) {
    %c0_i32 = arith.constant 0 : i32
    %c0_i32_0 = arith.constant 0 : i32
    return %arg0, %c0_i32 : i32, i32
  }
  func.func @transform_9(%arg0: i32) -> (i32, i32) {
    %c0_i32 = arith.constant 0 : i32
    %c0_i32_0 = arith.constant 0 : i32
    return %arg0, %c0_i32 : i32, i32
  }
}

</mosaic_0001>

<llo_original>
// kernel: tpu_custom_call.1
$region0: #{tpu_custom_call.1}
  #allocation0 [shape = 'u32[]', space=smem, size = 0x4, offset = 0x4, fixed_abs, tag = 'smem constant byte address 0x4 - core index']
  #allocation1 [shape = 'u32[144,128]{1,0:T(1,128)}', space=vmem, size = 0x12000, scoped, tag = 'internal scratch']
  %s0 = inlined_call_operand.hbm [shape: bf16[16,1024], index: 0, kind: input, shape index: {}]
  %s1 = inlined_call_operand.hbm [shape: bf16[1024,128], index: 1, kind: input, shape index: {}]
  %s2 = inlined_call_operand.hbm [shape: bf16[128,128], index: 2, kind: input, shape index: {}]
  %s3 = inlined_call_operand.hbm [shape: bf16[128,128], index: 3, kind: input, shape index: {}]
  %s4 = inlined_call_operand.hbm [shape: bf16[128,128], index: 4, kind: input, shape index: {}]
  %s5 = inlined_call_operand.vmem [shape: f32[4,128], index: 5, kind: input, shape index: {}]
  %s6 = inlined_call_operand.hbm [shape: f32[16,128], index: 6, kind: output, shape index: {0}]
  %s7 = inlined_call_operand.hbm [shape: f32[16,128], index: 7, kind: output, shape index: {1}]
  %s8 = inlined_call_operand.hbm [shape: f32[16,128], index: 8, kind: output, shape index: {2}]
  %s9 = inlined_call_operand.hbm [shape: f32[16,128], index: 9, kind: output, shape index: {3}]
  %10 = xla_tuple %s6, %s7, %s8, %s9
  %s11 = sld [smem:[#allocation0]]
  $region78: #{tpu_custom_call.1} parent=0
    _
  %s13 = ssub.s32 1, %s11
  %s14 = scalar_select 0, %s13, %s11
  $region1: #{tpu_custom_call.1} parent=0
    #allocation2 [shape = 'u8[32768]{0}', space=vmem, size = 0x8000, scoped, tag = 'input window, operand 0, single buffered']
    #allocation3 [shape = 's32[1]{0}', space=sflag, size = 0x4, scoped, tag = 'scoped memory for tpu_custom_call.1']
    #allocation4 [shape = 's32[1]{0}', space=sflag, size = 0x4, scoped, tag = 'scoped memory for tpu_custom_call.1']
    #allocation5 [shape = 'u8[262144]{0}', space=vmem, size = 0x40000, scoped, tag = 'input window, operand 1, single buffered']
    #allocation6 [shape = 's32[1]{0}', space=sflag, size = 0x4, scoped, tag = 'scoped memory for tpu_custom_call.1']
    #allocation7 [shape = 'u8[32768]{0}', space=vmem, size = 0x8000, scoped, tag = 'input window, operand 2, single buffered']
    #allocation8 [shape = 'u8[32768]{0}', space=vmem, size = 0x8000, scoped, tag = 'input window, operand 3, single buffered']
    #allocation9 [shape = 's32[1]{0}', space=sflag, size = 0x4, scoped, tag = 'scoped memory for tpu_custom_call.1']
    #allocation10 [shape = 'u8[32768]{0}', space=vmem, size = 0x8000, scoped, tag = 'input window, operand 4, single buffered']
    #allocation11 [shape = 'u8[8192]{0}', space=vmem, size = 0x2000, scoped, tag = 'output window, operand 0, single buffered']
    #allocation12 [shape = 'u8[8192]{0}', space=vmem, size = 0x2000, scoped, tag = 'output window, operand 1, single buffered']
    #allocation13 [shape = 's32[1]{0}', space=sflag, size = 0x4, scoped, tag = 'scoped memory for tpu_custom_call.1']
    #allocation14 [shape = 'u8[8192]{0}', space=vmem, size = 0x2000, scoped, tag = 'output window, operand 2, single buffered']
    #allocation15 [shape = 'u8[8192]{0}', space=vmem, size = 0x2000, scoped, tag = 'output window, operand 3, single buffered']
    #allocation16 [shape = 's32[1]{0}', space=sflag, size = 0x4, scoped, tag = 'scoped memory for tpu_custom_call.1']
    %15 = vsyncpa [#allocation3], 0
    %16 = vsyncpa [#allocation6], 0
    %17 = vsyncpa [#allocation9], 0
    %18 = vsyncpa [#allocation4], 0
    %19 = vsyncpa [#allocation13], 0
    %20 = vsyncpa [#allocation16], 0
    // Predicated region
    $region2: #{tpu_custom_call.1} parent=1 // pred_check
      _
    $region3: #{tpu_custom_call.1} parent=1 // pred_check_branch
      %22 = sbr.rel (0) target = $region5
    $region4: #{tpu_custom_call.1} parent=1 // pred_region
      %s24 = ssub.s32 1024, 1024
      %25 = vsyncadd [#allocation3], %s24
      %s26 = sshll.u32 [#allocation2], 4
      %s27 = int_to_ptr.vmem [resolvable:$true] %s26
      %32 = dma.hbm_to_vmem [thread:$0]  %s0, 1024, %s27, [#allocation3], 512, 512, 32
    $region5: #{tpu_custom_call.1} parent=1 // pred_fallthru
      _
    // Predicated region
    $region6: #{tpu_custom_call.1} parent=1 // pred_check
      _
    $region7: #{tpu_custom_call.1} parent=1 // pred_check_branch
      %34 = sbr.rel (0) target = $region9
    $region8: #{tpu_custom_call.1} parent=1 // pred_region
      %s36 = ssub.s32 8192, 8192
      %37 = vsyncadd [#allocation6], %s36
      %s38 = sshll.u32 [#allocation5], 4
      %s39 = int_to_ptr.vmem [resolvable:$true] %s38
      %44 = dma.hbm_to_vmem [thread:$0]  %s1, 8192, %s39, [#allocation6], 64, 64, 4
    $region9: #{tpu_custom_call.1} parent=1 // pred_fallthru
      _
    // Predicated region
    $region10: #{tpu_custom_call.1} parent=1 // pred_check
      _
    $region11: #{tpu_custom_call.1} parent=1 // pred_check_branch
      %46 = sbr.rel (0) target = $region13
    $region12: #{tpu_custom_call.1} parent=1 // pred_region
      %s48 = ssub.s32 1024, 1024
      %49 = vsyncadd [#allocation6], %s48
      %s50 = sshll.u32 [#allocation7], 4
      %s51 = int_to_ptr.vmem [resolvable:$true] %s50
      %56 = dma.hbm_to_vmem [thread:$0]  %s2, 1024, %s51, [#allocation6], 64, 64, 4
    $region13: #{tpu_custom_call.1} parent=1 // pred_fallthru
      _
    // Predicated region
    $region14: #{tpu_custom_call.1} parent=1 // pred_check
      _
    $region15: #{tpu_custom_call.1} parent=1 // pred_check_branch
      %58 = sbr.rel (0) target = $region17
    $region16: #{tpu_custom_call.1} parent=1 // pred_region
      %s60 = ssub.s32 1024, 1024
      %61 = vsyncadd [#allocation9], %s60
      %s62 = sshll.u32 [#allocation8], 4
      %s63 = int_to_ptr.vmem [resolvable:$true] %s62
      %68 = dma.hbm_to_vmem [thread:$0]  %s3, 1024, %s63, [#allocation9], 64, 64, 4
    $region17: #{tpu_custom_call.1} parent=1 // pred_fallthru
      _
    // Predicated region
    $region18: #{tpu_custom_call.1} parent=1 // pred_check
      _
    $region19: #{tpu_custom_call.1} parent=1 // pred_check_branch
      %70 = sbr.rel (0) target = $region21
    $region20: #{tpu_custom_call.1} parent=1 // pred_region
      %s72 = ssub.s32 1024, 1024
      %73 = vsyncadd [#allocation9], %s72
      %s74 = sshll.u32 [#allocation10], 4
      %s75 = int_to_ptr.vmem [resolvable:$true] %s74
      %80 = dma.hbm_to_vmem [thread:$0]  %s4, 1024, %s75, [#allocation9], 64, 64, 4
    $region21: #{tpu_custom_call.1} parent=1 // pred_fallthru
      _
    // Predicated region
    $region22: #{tpu_custom_call.1} parent=1 // pred_check
      _
    $region23: #{tpu_custom_call.1} parent=1 // pred_check_branch
      %82 = sbr.rel (0) target = $region25
    $region24: #{tpu_custom_call.1} parent=1 // pred_region
      _
    $region25: #{tpu_custom_call.1} parent=1 // pred_fallthru
      _
    // Predicated region
    $region26: #{tpu_custom_call.1} parent=1 // pred_check
      _
    $region27: #{tpu_custom_call.1} parent=1 // pred_check_branch
      %84 = sbr.rel (0) target = $region29
    $region28: #{tpu_custom_call.1} parent=1 // pred_region
      %85 = dma.done [#allocation3], 1024
    $region29: #{tpu_custom_call.1} parent=1 // pred_fallthru
      _
    // Predicated region
    $region30: #{tpu_custom_call.1} parent=1 // pred_check
      _
    $region31: #{tpu_custom_call.1} parent=1 // pred_check_branch
      %87 = sbr.rel (0) target = $region33
    $region32: #{tpu_custom_call.1} parent=1 // pred_region
      %88 = dma.done [#allocation6], 8192
    $region33: #{tpu_custom_call.1} parent=1 // pred_fallthru
      _
    // Predicated region
    $region34: #{tpu_custom_call.1} parent=1 // pred_check
      _
    $region35: #{tpu_custom_call.1} parent=1 // pred_check_branch
      %90 = sbr.rel (0) target = $region37
    $region36: #{tpu_custom_call.1} parent=1 // pred_region
      %91 = dma.done [#allocation6], 1024
    $region37: #{tpu_custom_call.1} parent=1 // pred_fallthru
      _
    // Predicated region
    $region38: #{tpu_custom_call.1} parent=1 // pred_check
      _
    $region39: #{tpu_custom_call.1} parent=1 // pred_check_branch
      %93 = sbr.rel (0) target = $region41
    $region40: #{tpu_custom_call.1} parent=1 // pred_region
      %94 = dma.done [#allocation9], 1024
    $region41: #{tpu_custom_call.1} parent=1 // pred_fallthru
      _
    // Predicated region
    $region42: #{tpu_custom_call.1} parent=1 // pred_check
      _
    $region43: #{tpu_custom_call.1} parent=1 // pred_check_branch
      %96 = sbr.rel (0) target = $region45
    $region44: #{tpu_custom_call.1} parent=1 // pred_region
      %97 = dma.done [#allocation9], 1024
    $region45: #{tpu_custom_call.1} parent=1 // pred_fallthru
      _
    %v99 = vld [vmem:[#allocation2] sm:$0xff]
    %v100 = vld [vmem:[#allocation2 + $0x8] sm:$0xff]
    %v101 = vld [vmem:[#allocation2 + $0x10] sm:$0xff]
    %v102 = vld [vmem:[#allocation2 + $0x18] sm:$0xff]
    %v103 = vld [vmem:[#allocation2 + $0x20] sm:$0xff]
    %v104 = vld [vmem:[#allocation2 + $0x28] sm:$0xff]
    %v105 = vld [vmem:[#allocation2 + $0x30] sm:$0xff]
    %v106 = vld [vmem:[#allocation2 + $0x38] sm:$0xff]
    %v107 = vld [vmem:[#allocation5] sm:$0xf]
    %v108 = vld [vmem:[#allocation5 + $0x4] sm:$0xf]
    %v109 = vld [vmem:[#allocation5 + $0x8] sm:$0xf]
    %v110 = vld [vmem:[#allocation5 + $0xc] sm:$0xf]
    %v111 = vld [vmem:[#allocation5 + $0x10] sm:$0xf]
    %v112 = vld [vmem:[#allocation5 + $0x14] sm:$0xf]
    %v113 = vld [vmem:[#allocation5 + $0x18] sm:$0xf]
    %v114 = vld [vmem:[#allocation5 + $0x1c] sm:$0xf]
    %v115 = vld [vmem:[#allocation5 + $0x20] sm:$0xf]
    %v116 = vld [vmem:[#allocation5 + $0x24] sm:$0xf]
    %v117 = vld [vmem:[#allocation5 + $0x28] sm:$0xf]
    %v118 = vld [vmem:[#allocation5 + $0x2c] sm:$0xf]
    %v119 = vld [vmem:[#allocation5 + $0x30] sm:$0xf]
    %v120 = vld [vmem:[#allocation5 + $0x34] sm:$0xf]
    %v121 = vld [vmem:[#allocation5 + $0x38] sm:$0xf]
    %v122 = vld [vmem:[#allocation5 + $0x3c] sm:$0xf]
    %v123 = vld [vmem:[#allocation5 + $0x40] sm:$0xf]
    %v124 = vld [vmem:[#allocation5 + $0x44] sm:$0xf]
    %v125 = vld [vmem:[#allocation5 + $0x48] sm:$0xf]
    %v126 = vld [vmem:[#allocation5 + $0x4c] sm:$0xf]
    %v127 = vld [vmem:[#allocation5 + $0x50] sm:$0xf]
    %v128 = vld [vmem:[#allocation5 + $0x54] sm:$0xf]
    %v129 = vld [vmem:[#allocation5 + $0x58] sm:$0xf]
    %v130 = vld [vmem:[#allocation5 + $0x5c] sm:$0xf]
    %v131 = vld [vmem:[#allocation5 + $0x60] sm:$0xf]
    %v132 = vld [vmem:[#allocation5 + $0x64] sm:$0xf]
    %v133 = vld [vmem:[#allocation5 + $0x68] sm:$0xf]
    %v134 = vld [vmem:[#allocation5 + $0x6c] sm:$0xf]
    %v135 = vld [vmem:[#allocation5 + $0x70] sm:$0xf]
    %v136 = vld [vmem:[#allocation5 + $0x74] sm:$0xf]
    %v137 = vld [vmem:[#allocation5 + $0x78] sm:$0xf]
    %v138 = vld [vmem:[#allocation5 + $0x7c] sm:$0xf]
    %v139 = vld [vmem:[#allocation5 + $0x80] sm:$0xf]
    %v140 = vld [vmem:[#allocation5 + $0x84] sm:$0xf]
    %v141 = vld [vmem:[#allocation5 + $0x88] sm:$0xf]
    %v142 = vld [vmem:[#allocation5 + $0x8c] sm:$0xf]
    %v143 = vld [vmem:[#allocation5 + $0x90] sm:$0xf]
    %v144 = vld [vmem:[#allocation5 + $0x94] sm:$0xf]
    %v145 = vld [vmem:[#allocation5 + $0x98] sm:$0xf]
    %v146 = vld [vmem:[#allocation5 + $0x9c] sm:$0xf]
    %v147 = vld [vmem:[#allocation5 + $0xa0] sm:$0xf]
    %v148 = vld [vmem:[#allocation5 + $0xa4] sm:$0xf]
    %v149 = vld [vmem:[#allocation5 + $0xa8] sm:$0xf]
    %v150 = vld [vmem:[#allocation5 + $0xac] sm:$0xf]
    %v151 = vld [vmem:[#allocation5 + $0xb0] sm:$0xf]
    %v152 = vld [vmem:[#allocation5 + $0xb4] sm:$0xf]
    %v153 = vld [vmem:[#allocation5 + $0xb8] sm:$0xf]
    %v154 = vld [vmem:[#allocation5 + $0xbc] sm:$0xf]
    %v155 = vld [vmem:[#allocation5 + $0xc0] sm:$0xf]
    %v156 = vld [vmem:[#allocation5 + $0xc4] sm:$0xf]
    %v157 = vld [vmem:[#allocation5 + $0xc8] sm:$0xf]
    %v158 = vld [vmem:[#allocation5 + $0xcc] sm:$0xf]
    %v159 = vld [vmem:[#allocation5 + $0xd0] sm:$0xf]
    %v160 = vld [vmem:[#allocation5 + $0xd4] sm:$0xf]
    %v161 = vld [vmem:[#allocation5 + $0xd8] sm:$0xf]
    %v162 = vld [vmem:[#allocation5 + $0xdc] sm:$0xf]
    %v163 = vld [vmem:[#allocation5 + $0xe0] sm:$0xf]
    %v164 = vld [vmem:[#allocation5 + $0xe4] sm:$0xf]
    %v165 = vld [vmem:[#allocation5 + $0xe8] sm:$0xf]
    %v166 = vld [vmem:[#allocation5 + $0xec] sm:$0xf]
    %v167 = vld [vmem:[#allocation5 + $0xf0] sm:$0xf]
    %v168 = vld [vmem:[#allocation5 + $0xf4] sm:$0xf]
    %v169 = vld [vmem:[#allocation5 + $0xf8] sm:$0xf]
    %v170 = vld [vmem:[#allocation5 + $0xfc] sm:$0xf]
    %v171 = vld [vmem:[#allocation5 + $0x100] sm:$0xf]
    %v172 = vld [vmem:[#allocation5 + $0x104] sm:$0xf]
    %v173 = vld [vmem:[#allocation5 + $0x108] sm:$0xf]
    %v174 = vld [vmem:[#allocation5 + $0x10c] sm:$0xf]
    %v175 = vld [vmem:[#allocation5 + $0x110] sm:$0xf]
    %v176 = vld [vmem:[#allocation5 + $0x114] sm:$0xf]
    %v177 = vld [vmem:[#allocation5 + $0x118] sm:$0xf]
    %v178 = vld [vmem:[#allocation5 + $0x11c] sm:$0xf]
    %v179 = vld [vmem:[#allocation5 + $0x120] sm:$0xf]
    %v180 = vld [vmem:[#allocation5 + $0x124] sm:$0xf]
    %v181 = vld [vmem:[#allocation5 + $0x128] sm:$0xf]
    %v182 = vld [vmem:[#allocation5 + $0x12c] sm:$0xf]
    %v183 = vld [vmem:[#allocation5 + $0x130] sm:$0xf]
    %v184 = vld [vmem:[#allocation5 + $0x134] sm:$0xf]
    %v185 = vld [vmem:[#allocation5 + $0x138] sm:$0xf]
    %v186 = vld [vmem:[#allocation5 + $0x13c] sm:$0xf]
    %v187 = vld [vmem:[#allocation5 + $0x140] sm:$0xf]
    %v188 = vld [vmem:[#allocation5 + $0x144] sm:$0xf]
    %v189 = vld [vmem:[#allocation5 + $0x148] sm:$0xf]
    %v190 = vld [vmem:[#allocation5 + $0x14c] sm:$0xf]
    %v191 = vld [vmem:[#allocation5 + $0x150] sm:$0xf]
    %v192 = vld [vmem:[#allocation5 + $0x154] sm:$0xf]
    %v193 = vld [vmem:[#allocation5 + $0x158] sm:$0xf]
    %v194 = vld [vmem:[#allocation5 + $0x15c] sm:$0xf]
    %v195 = vld [vmem:[#allocation5 + $0x160] sm:$0xf]
    %v196 = vld [vmem:[#allocation5 + $0x164] sm:$0xf]
    %v197 = vld [vmem:[#allocation5 + $0x168] sm:$0xf]
    %v198 = vld [vmem:[#allocation5 + $0x16c] sm:$0xf]
    %v199 = vld [vmem:[#allocation5 + $0x170] sm:$0xf]
    %v200 = vld [vmem:[#allocation5 + $0x174] sm:$0xf]
    %v201 = vld [vmem:[#allocation5 + $0x178] sm:$0xf]
    %v202 = vld [vmem:[#allocation5 + $0x17c] sm:$0xf]
    %v203 = vld [vmem:[#allocation5 + $0x180] sm:$0xf]
    %v204 = vld [vmem:[#allocation5 + $0x184] sm:$0xf]
    %v205 = vld [vmem:[#allocation5 + $0x188] sm:$0xf]
    %v206 = vld [vmem:[#allocation5 + $0x18c] sm:$0xf]
    %v207 = vld [vmem:[#allocation5 + $0x190] sm:$0xf]
    %v208 = vld [vmem:[#allocation5 + $0x194] sm:$0xf]
    %v209 = vld [vmem:[#allocation5 + $0x198] sm:$0xf]
    %v210 = vld [vmem:[#allocation5 + $0x19c] sm:$0xf]
    %v211 = vld [vmem:[#allocation5 + $0x1a0] sm:$0xf]
    %v212 = vld [vmem:[#allocation5 + $0x1a4] sm:$0xf]
    %v213 = vld [vmem:[#allocation5 + $0x1a8] sm:$0xf]
    %v214 = vld [vmem:[#allocation5 + $0x1ac] sm:$0xf]
    %v215 = vld [vmem:[#allocation5 + $0x1b0] sm:$0xf]
    %v216 = vld [vmem:[#allocation5 + $0x1b4] sm:$0xf]
    %v217 = vld [vmem:[#allocation5 + $0x1b8] sm:$0xf]
    %v218 = vld [vmem:[#allocation5 + $0x1bc] sm:$0xf]
    %v219 = vld [vmem:[#allocation5 + $0x1c0] sm:$0xf]
    %v220 = vld [vmem:[#allocation5 + $0x1c4] sm:$0xf]
    %v221 = vld [vmem:[#allocation5 + $0x1c8] sm:$0xf]
    %v222 = vld [vmem:[#allocation5 + $0x1cc] sm:$0xf]
    %v223 = vld [vmem:[#allocation5 + $0x1d0] sm:$0xf]
    %v224 = vld [vmem:[#allocation5 + $0x1d4] sm:$0xf]
    %v225 = vld [vmem:[#allocation5 + $0x1d8] sm:$0xf]
    %v226 = vld [vmem:[#allocation5 + $0x1dc] sm:$0xf]
    %v227 = vld [vmem:[#allocation5 + $0x1e0] sm:$0xf]
    %v228 = vld [vmem:[#allocation5 + $0x1e4] sm:$0xf]
    %v229 = vld [vmem:[#allocation5 + $0x1e8] sm:$0xf]
    %v230 = vld [vmem:[#allocation5 + $0x1ec] sm:$0xf]
    %v231 = vld [vmem:[#allocation5 + $0x1f0] sm:$0xf]
    %v232 = vld [vmem:[#allocation5 + $0x1f4] sm:$0xf]
    %v233 = vld [vmem:[#allocation5 + $0x1f8] sm:$0xf]
    %v234 = vld [vmem:[#allocation5 + $0x1fc] sm:$0xf]
    %v235 = vld [vmem:[%s5] sm:$0x1]
    %v236 = vlaneseq
    %v237 = vshrl.u32 %v236, 7
    %v238 = vsub.s32 0, %v237
    %v239 = vrot.slane %v235, %v238
    %v248 = vunpack.c.l.b16 %v99
    %v249 = vunpack.c.h.b16 %v99
    %v250 = vunpack.c.l.b16 %v100
    %v251 = vunpack.c.h.b16 %v100
    %v252 = vunpack.c.l.b16 %v101
    %v253 = vunpack.c.h.b16 %v101
    %v254 = vunpack.c.l.b16 %v102
    %v255 = vunpack.c.h.b16 %v102
    %v256 = vunpack.c.l.b16 %v103
    %v257 = vunpack.c.h.b16 %v103
    %v258 = vunpack.c.l.b16 %v104
    %v259 = vunpack.c.h.b16 %v104
    %v260 = vunpack.c.l.b16 %v105
    %v261 = vunpack.c.h.b16 %v105
    %v262 = vunpack.c.l.b16 %v106
    %v263 = vunpack.c.h.b16 %v106
    %v264 = vpack.c.b16 %v256, %v248
    %v265 = vpack.c.b16 %v257, %v249
    %v266 = vpack.c.b16 %v258, %v250
    %v267 = vpack.c.b16 %v259, %v251
    %v268 = vpack.c.b16 %v260, %v252
    %v269 = vpack.c.b16 %v261, %v253
    %v270 = vpack.c.b16 %v262, %v254
    %v271 = vpack.c.b16 %v263, %v255
    %v408 = vunpack.c.l.b16 %v107
    %v409 = vunpack.c.l.b16 %v108
    %v410 = vunpack.c.l.b16 %v109
    %v411 = vunpack.c.l.b16 %v110
    %v412 = vunpack.c.l.b16 %v111
    %v413 = vunpack.c.l.b16 %v112
    %v414 = vunpack.c.l.b16 %v113
    %v415 = vunpack.c.l.b16 %v114
    %v416 = vunpack.c.l.b16 %v115
    %v417 = vunpack.c.l.b16 %v116
    %v418 = vunpack.c.l.b16 %v117
    %v419 = vunpack.c.l.b16 %v118
    %v420 = vunpack.c.l.b16 %v119
    %v421 = vunpack.c.l.b16 %v120
    %v422 = vunpack.c.l.b16 %v121
    %v423 = vunpack.c.l.b16 %v122
    %v424 = vunpack.c.l.b16 %v123
    %v425 = vunpack.c.l.b16 %v124
    %v426 = vunpack.c.l.b16 %v125
    %v427 = vunpack.c.l.b16 %v126
    %v428 = vunpack.c.l.b16 %v127
    %v429 = vunpack.c.l.b16 %v128
    %v430 = vunpack.c.l.b16 %v129
    %v431 = vunpack.c.l.b16 %v130
    %v432 = vunpack.c.l.b16 %v131
    %v433 = vunpack.c.l.b16 %v132
    %v434 = vunpack.c.l.b16 %v133
    %v435 = vunpack.c.l.b16 %v134
    %v436 = vunpack.c.l.b16 %v135
    %v437 = vunpack.c.l.b16 %v136
    %v438 = vunpack.c.l.b16 %v137
    %v439 = vunpack.c.l.b16 %v138
    %v440 = vunpack.c.l.b16 %v139
    %v441 = vunpack.c.l.b16 %v140
    %v442 = vunpack.c.l.b16 %v141
    %v443 = vunpack.c.l.b16 %v142
    %v444 = vunpack.c.l.b16 %v143
    %v445 = vunpack.c.l.b16 %v144
    %v446 = vunpack.c.l.b16 %v145
    %v447 = vunpack.c.l.b16 %v146
    %v448 = vunpack.c.l.b16 %v147
    %v449 = vunpack.c.l.b16 %v148
    %v450 = vunpack.c.l.b16 %v149
    %v451 = vunpack.c.l.b16 %v150
    %v452 = vunpack.c.l.b16 %v151
    %v453 = vunpack.c.l.b16 %v152
    %v454 = vunpack.c.l.b16 %v153
    %v455 = vunpack.c.l.b16 %v154
    %v456 = vunpack.c.l.b16 %v155
    %v457 = vunpack.c.l.b16 %v156
    %v458 = vunpack.c.l.b16 %v157
    %v459 = vunpack.c.l.b16 %v158
    %v460 = vunpack.c.l.b16 %v159
    %v461 = vunpack.c.l.b16 %v160
    %v462 = vunpack.c.l.b16 %v161
    %v463 = vunpack.c.l.b16 %v162
    %v464 = vunpack.c.l.b16 %v163
    %v465 = vunpack.c.l.b16 %v164
    %v466 = vunpack.c.l.b16 %v165
    %v467 = vunpack.c.l.b16 %v166
    %v468 = vunpack.c.l.b16 %v167
    %v469 = vunpack.c.l.b16 %v168
    %v470 = vunpack.c.l.b16 %v169
    %v471 = vunpack.c.l.b16 %v170
    %v472 = vunpack.c.l.b16 %v171
    %v473 = vunpack.c.l.b16 %v172
    %v474 = vunpack.c.l.b16 %v173
    %v475 = vunpack.c.l.b16 %v174
    %v476 = vunpack.c.l.b16 %v175
    %v477 = vunpack.c.l.b16 %v176
    %v478 = vunpack.c.l.b16 %v177
    %v479 = vunpack.c.l.b16 %v178
    %v480 = vunpack.c.l.b16 %v179
    %v481 = vunpack.c.l.b16 %v180
    %v482 = vunpack.c.l.b16 %v181
    %v483 = vunpack.c.l.b16 %v182
    %v484 = vunpack.c.l.b16 %v183
    %v485 = vunpack.c.l.b16 %v184
    %v486 = vunpack.c.l.b16 %v185
    %v487 = vunpack.c.l.b16 %v186
    %v488 = vunpack.c.l.b16 %v187
    %v489 = vunpack.c.l.b16 %v188
    %v490 = vunpack.c.l.b16 %v189
    %v491 = vunpack.c.l.b16 %v190
    %v492 = vunpack.c.l.b16 %v191
    %v493 = vunpack.c.l.b16 %v192
    %v494 = vunpack.c.l.b16 %v193
    %v495 = vunpack.c.l.b16 %v194
    %v496 = vunpack.c.l.b16 %v195
    %v497 = vunpack.c.l.b16 %v196
    %v498 = vunpack.c.l.b16 %v197
    %v499 = vunpack.c.l.b16 %v198
    %v500 = vunpack.c.l.b16 %v199
    %v501 = vunpack.c.l.b16 %v200
    %v502 = vunpack.c.l.b16 %v201
    %v503 = vunpack.c.l.b16 %v202
    %v504 = vunpack.c.l.b16 %v203
    %v505 = vunpack.c.l.b16 %v204
    %v506 = vunpack.c.l.b16 %v205
    %v507 = vunpack.c.l.b16 %v206
    %v508 = vunpack.c.l.b16 %v207
    %v509 = vunpack.c.l.b16 %v208
    %v510 = vunpack.c.l.b16 %v209
    %v511 = vunpack.c.l.b16 %v210
    %v512 = vunpack.c.l.b16 %v211
    %v513 = vunpack.c.l.b16 %v212
    %v514 = vunpack.c.l.b16 %v213
    %v515 = vunpack.c.l.b16 %v214
    %v516 = vunpack.c.l.b16 %v215
    %v517 = vunpack.c.l.b16 %v216
    %v518 = vunpack.c.l.b16 %v217
    %v519 = vunpack.c.l.b16 %v218
    %v520 = vunpack.c.l.b16 %v219
    %v521 = vunpack.c.l.b16 %v220
    %v522 = vunpack.c.l.b16 %v221
    %v523 = vunpack.c.l.b16 %v222
    %v524 = vunpack.c.l.b16 %v223
    %v525 = vunpack.c.l.b16 %v224
    %v526 = vunpack.c.l.b16 %v225
    %v527 = vunpack.c.l.b16 %v226
    %v528 = vunpack.c.l.b16 %v227
    %v529 = vunpack.c.l.b16 %v228
    %v530 = vunpack.c.l.b16 %v229
    %v531 = vunpack.c.l.b16 %v230
    %v532 = vunpack.c.l.b16 %v231
    %v533 = vunpack.c.l.b16 %v232
    %v534 = vunpack.c.l.b16 %v233
    %v535 = vunpack.c.l.b16 %v234
    %v536 = vpack.c.b16 %v409, %v408
    %v537 = vpack.c.b16 %v411, %v410
    %v538 = vpack.c.b16 %v413, %v412
    %v539 = vpack.c.b16 %v415, %v414
    %v540 = vpack.c.b16 %v417, %v416
    %v541 = vpack.c.b16 %v419, %v418
    %v542 = vpack.c.b16 %v421, %v420
    %v543 = vpack.c.b16 %v423, %v422
    %v544 = vpack.c.b16 %v425, %v424
    %v545 = vpack.c.b16 %v427, %v426
    %v546 = vpack.c.b16 %v429, %v428
    %v547 = vpack.c.b16 %v431, %v430
    %v548 = vpack.c.b16 %v433, %v432
    %v549 = vpack.c.b16 %v435, %v434
    %v550 = vpack.c.b16 %v437, %v436
    %v551 = vpack.c.b16 %v439, %v438
    %v552 = vpack.c.b16 %v441, %v440
    %v553 = vpack.c.b16 %v443, %v442
    %v554 = vpack.c.b16 %v445, %v444
    %v555 = vpack.c.b16 %v447, %v446
    %v556 = vpack.c.b16 %v449, %v448
    %v557 = vpack.c.b16 %v451, %v450
    %v558 = vpack.c.b16 %v453, %v452
    %v559 = vpack.c.b16 %v455, %v454
    %v560 = vpack.c.b16 %v457, %v456
    %v561 = vpack.c.b16 %v459, %v458
    %v562 = vpack.c.b16 %v461, %v460
    %v563 = vpack.c.b16 %v463, %v462
    %v564 = vpack.c.b16 %v465, %v464
    %v565 = vpack.c.b16 %v467, %v466
    %v566 = vpack.c.b16 %v469, %v468
    %v567 = vpack.c.b16 %v471, %v470
    %v568 = vpack.c.b16 %v473, %v472
    %v569 = vpack.c.b16 %v475, %v474
    %v570 = vpack.c.b16 %v477, %v476
    %v571 = vpack.c.b16 %v479, %v478
    %v572 = vpack.c.b16 %v481, %v480
    %v573 = vpack.c.b16 %v483, %v482
    %v574 = vpack.c.b16 %v485, %v484
    %v575 = vpack.c.b16 %v487, %v486
    %v576 = vpack.c.b16 %v489, %v488
    %v577 = vpack.c.b16 %v491, %v490
    %v578 = vpack.c.b16 %v493, %v492
    %v579 = vpack.c.b16 %v495, %v494
    %v580 = vpack.c.b16 %v497, %v496
    %v581 = vpack.c.b16 %v499, %v498
    %v582 = vpack.c.b16 %v501, %v500
    %v583 = vpack.c.b16 %v503, %v502
    %v584 = vpack.c.b16 %v505, %v504
    %v585 = vpack.c.b16 %v507, %v506
    %v586 = vpack.c.b16 %v509, %v508
    %v587 = vpack.c.b16 %v511, %v510
    %v588 = vpack.c.b16 %v513, %v512
    %v589 = vpack.c.b16 %v515, %v514
    %v590 = vpack.c.b16 %v517, %v516
    %v591 = vpack.c.b16 %v519, %v518
    %v592 = vpack.c.b16 %v521, %v520
    %v593 = vpack.c.b16 %v523, %v522
    %v594 = vpack.c.b16 %v525, %v524
    %v595 = vpack.c.b16 %v527, %v526
    %v596 = vpack.c.b16 %v529, %v528
    %v597 = vpack.c.b16 %v531, %v530
    %v598 = vpack.c.b16 %v533, %v532
    %v599 = vpack.c.b16 %v535, %v534
    %664 = vmatprep.subr.bf16.mxu0 0
    %665 = vmatpush1.bf16.msra.mxu0 %v536
    %666 = vmatprep.subr.bf16.mxu0 0
    %667 = vmatpush1.bf16.msra.mxu0 %v537
    %668 = vmatprep.subr.bf16.mxu0 0
    %669 = vmatpush1.bf16.msra.mxu0 %v538
    %670 = vmatprep.subr.bf16.mxu0 0
    %671 = vmatpush1.bf16.msra.mxu0 %v539
    %672 = vmatprep.subr.bf16.mxu0 0
    %673 = vmatpush1.bf16.msra.mxu0 %v540
    %674 = vmatprep.subr.bf16.mxu0 0
    %675 = vmatpush1.bf16.msra.mxu0 %v541
    %676 = vmatprep.subr.bf16.mxu0 0
    %677 = vmatpush1.bf16.msra.mxu0 %v542
    %678 = vmatprep.subr.bf16.mxu0 0
    %679 = vmatpush1.bf16.msra.mxu0 %v543
    %680 = vmatprep.subr.bf16.mxu0 0
    %681 = vmatpush1.bf16.msra.mxu0 %v544
    %682 = vmatprep.subr.bf16.mxu0 0
    %683 = vmatpush1.bf16.msra.mxu0 %v545
    %684 = vmatprep.subr.bf16.mxu0 0
    %685 = vmatpush1.bf16.msra.mxu0 %v546
    %686 = vmatprep.subr.bf16.mxu0 0
    %687 = vmatpush1.bf16.msra.mxu0 %v547
    %688 = vmatprep.subr.bf16.mxu0 0
    %689 = vmatpush1.bf16.msra.mxu0 %v548
    %690 = vmatprep.subr.bf16.mxu0 0
    %691 = vmatpush1.bf16.msra.mxu0 %v549
    %692 = vmatprep.subr.bf16.mxu0 0
    %693 = vmatpush1.bf16.msra.mxu0 %v550
    %694 = vmatprep.subr.bf16.mxu0 0
    %695 = vmatpush1.bf16.msra.mxu0 %v551
    %696 = vmatprep.mubr.bf16.mxu0 %v265
    %697 = vmatmul.mubr.bf16.gmra.mrb[0].mxu0 %v264
    %v698 = vpop.f32.mrb[0].mxu0
    %v699 = vadd.f32 %v239, %v698
    %v700 = vpop.f32.mrb[0].mxu0
    %v701 = vpop.f32.mrb[0].mxu0
    %v702 = vadd.f32 %v239, %v701
    %v703 = vpop.f32.mrb[0].mxu0
    %704 = vdwg.mxu0
    %705 = vmatprep.subr.bf16.mxu0 0
    %706 = vmatpush1.bf16.msra.mxu0 %v552
    %707 = vmatprep.subr.bf16.mxu0 0
    %708 = vmatpush1.bf16.msra.mxu0 %v553
    %709 = vmatprep.subr.bf16.mxu0 0
    %710 = vmatpush1.bf16.msra.mxu0 %v554
    %711 = vmatprep.subr.bf16.mxu0 0
    %712 = vmatpush1.bf16.msra.mxu0 %v555
    %713 = vmatprep.subr.bf16.mxu0 0
    %714 = vmatpush1.bf16.msra.mxu0 %v556
    %715 = vmatprep.subr.bf16.mxu0 0
    %716 = vmatpush1.bf16.msra.mxu0 %v557
    %717 = vmatprep.subr.bf16.mxu0 0
    %718 = vmatpush1.bf16.msra.mxu0 %v558
    %719 = vmatprep.subr.bf16.mxu0 0
    %720 = vmatpush1.bf16.msra.mxu0 %v559
    %721 = vmatprep.subr.bf16.mxu0 0
    %722 = vmatpush1.bf16.msra.mxu0 %v560
    %723 = vmatprep.subr.bf16.mxu0 0
    %724 = vmatpush1.bf16.msra.mxu0 %v561
    %725 = vmatprep.subr.bf16.mxu0 0
    %726 = vmatpush1.bf16.msra.mxu0 %v562
    %727 = vmatprep.subr.bf16.mxu0 0
    %728 = vmatpush1.bf16.msra.mxu0 %v563
    %729 = vmatprep.subr.bf16.mxu0 0
    %730 = vmatpush1.bf16.msra.mxu0 %v564
    %731 = vmatprep.subr.bf16.mxu0 0
    %732 = vmatpush1.bf16.msra.mxu0 %v565
    %733 = vmatprep.subr.bf16.mxu0 0
    %734 = vmatpush1.bf16.msra.mxu0 %v566
    %735 = vmatprep.subr.bf16.mxu0 0
    %736 = vmatpush1.bf16.msra.mxu0 %v567
    %737 = vmatprep.mubr.bf16.mxu0 %v267
    %738 = vmatmul.mubr.bf16.gmra.mrb[0].mxu0 %v266
    %v739 = vpop.f32.mrb[0].mxu0
    %v740 = vadd.f32 %v699, %v739
    %v741 = vpop.f32.mrb[0].mxu0
    %v742 = vpop.f32.mrb[0].mxu0
    %v743 = vadd.f32 %v702, %v742
    %v744 = vpop.f32.mrb[0].mxu0
    %745 = vdwg.mxu0
    %746 = vmatprep.subr.bf16.mxu0 0
    %747 = vmatpush1.bf16.msra.mxu0 %v568
    %748 = vmatprep.subr.bf16.mxu0 0
    %749 = vmatpush1.bf16.msra.mxu0 %v569
    %750 = vmatprep.subr.bf16.mxu0 0
    %751 = vmatpush1.bf16.msra.mxu0 %v570
    %752 = vmatprep.subr.bf16.mxu0 0
    %753 = vmatpush1.bf16.msra.mxu0 %v571
    %754 = vmatprep.subr.bf16.mxu0 0
    %755 = vmatpush1.bf16.msra.mxu0 %v572
    %756 = vmatprep.subr.bf16.mxu0 0
    %757 = vmatpush1.bf16.msra.mxu0 %v573
    %758 = vmatprep.subr.bf16.mxu0 0
    %759 = vmatpush1.bf16.msra.mxu0 %v574
    %760 = vmatprep.subr.bf16.mxu0 0
    %761 = vmatpush1.bf16.msra.mxu0 %v575
    %762 = vmatprep.subr.bf16.mxu0 0
    %763 = vmatpush1.bf16.msra.mxu0 %v576
    %764 = vmatprep.subr.bf16.mxu0 0
    %765 = vmatpush1.bf16.msra.mxu0 %v577
    %766 = vmatprep.subr.bf16.mxu0 0
    %767 = vmatpush1.bf16.msra.mxu0 %v578
    %768 = vmatprep.subr.bf16.mxu0 0
    %769 = vmatpush1.bf16.msra.mxu0 %v579
    %770 = vmatprep.subr.bf16.mxu0 0
    %771 = vmatpush1.bf16.msra.mxu0 %v580
    %772 = vmatprep.subr.bf16.mxu0 0
    %773 = vmatpush1.bf16.msra.mxu0 %v581
    %774 = vmatprep.subr.bf16.mxu0 0
    %775 = vmatpush1.bf16.msra.mxu0 %v582
    %776 = vmatprep.subr.bf16.mxu0 0
    %777 = vmatpush1.bf16.msra.mxu0 %v583
    %778 = vmatprep.mubr.bf16.mxu0 %v269
    %779 = vmatmul.mubr.bf16.gmra.mrb[0].mxu0 %v268
    %v780 = vpop.f32.mrb[0].mxu0
    %v781 = vadd.f32 %v740, %v780
    %v782 = vpop.f32.mrb[0].mxu0
    %v783 = vpop.f32.mrb[0].mxu0
    %v784 = vadd.f32 %v743, %v783
    %v785 = vpop.f32.mrb[0].mxu0
    %786 = vdwg.mxu0
    %787 = vmatprep.subr.bf16.mxu0 0
    %788 = vmatpush1.bf16.msra.mxu0 %v584
    %789 = vmatprep.subr.bf16.mxu0 0
    %790 = vmatpush1.bf16.msra.mxu0 %v585
    %791 = vmatprep.subr.bf16.mxu0 0
    %792 = vmatpush1.bf16.msra.mxu0 %v586
    %793 = vmatprep.subr.bf16.mxu0 0
    %794 = vmatpush1.bf16.msra.mxu0 %v587
    %795 = vmatprep.subr.bf16.mxu0 0
    %796 = vmatpush1.bf16.msra.mxu0 %v588
    %797 = vmatprep.subr.bf16.mxu0 0
    %798 = vmatpush1.bf16.msra.mxu0 %v589
    %799 = vmatprep.subr.bf16.mxu0 0
    %800 = vmatpush1.bf16.msra.mxu0 %v590
    %801 = vmatprep.subr.bf16.mxu0 0
    %802 = vmatpush1.bf16.msra.mxu0 %v591
    %803 = vmatprep.subr.bf16.mxu0 0
    %804 = vmatpush1.bf16.msra.mxu0 %v592
    %805 = vmatprep.subr.bf16.mxu0 0
    %806 = vmatpush1.bf16.msra.mxu0 %v593
    %807 = vmatprep.subr.bf16.mxu0 0
    %808 = vmatpush1.bf16.msra.mxu0 %v594
    %809 = vmatprep.subr.bf16.mxu0 0
    %810 = vmatpush1.bf16.msra.mxu0 %v595
    %811 = vmatprep.subr.bf16.mxu0 0
    %812 = vmatpush1.bf16.msra.mxu0 %v596
    %813 = vmatprep.subr.bf16.mxu0 0
    %814 = vmatpush1.bf16.msra.mxu0 %v597
    %815 = vmatprep.subr.bf16.mxu0 0
    %816 = vmatpush1.bf16.msra.mxu0 %v598
    %817 = vmatprep.subr.bf16.mxu0 0
    %818 = vmatpush1.bf16.msra.mxu0 %v599
    %819 = vmatprep.mubr.bf16.mxu0 %v271
    %820 = vmatmul.mubr.bf16.gmra.mrb[0].mxu0 %v270
    %v821 = vpop.f32.mrb[0].mxu0
    %v822 = vadd.f32 %v781, %v821
    %v823 = vpop.f32.mrb[0].mxu0
    %v824 = vpop.f32.mrb[0].mxu0
    %v825 = vadd.f32 %v784, %v824
    %v826 = vpop.f32.mrb[0].mxu0
    %827 = vdwg.mxu0
    %v828 = vmax.f32 %v822, 0.0
    %v829 = vmax.f32 %v825, 0.0
    %830 = vst [vmem:[#allocation12] sm:$0xff] %v828
    %831 = vst [vmem:[#allocation12 + $0x8] sm:$0xff] %v829
    %v832 = vpack.c.bf16 %v829, %v828
    %v833 = vld [vmem:[#allocation7] sm:$0xf]
    %v834 = vld [vmem:[#allocation7 + $0x4] sm:$0xf]
    %v835 = vld [vmem:[#allocation7 + $0x8] sm:$0xf]
    %v836 = vld [vmem:[#allocation7 + $0xc] sm:$0xf]
    %v837 = vld [vmem:[#allocation7 + $0x10] sm:$0xf]
    %v838 = vld [vmem:[#allocation7 + $0x14] sm:$0xf]
    %v839 = vld [vmem:[#allocation7 + $0x18] sm:$0xf]
    %v840 = vld [vmem:[#allocation7 + $0x1c] sm:$0xf]
    %v841 = vld [vmem:[#allocation7 + $0x20] sm:$0xf]
    %v842 = vld [vmem:[#allocation7 + $0x24] sm:$0xf]
    %v843 = vld [vmem:[#allocation7 + $0x28] sm:$0xf]
    %v844 = vld [vmem:[#allocation7 + $0x2c] sm:$0xf]
    %v845 = vld [vmem:[#allocation7 + $0x30] sm:$0xf]
    %v846 = vld [vmem:[#allocation7 + $0x34] sm:$0xf]
    %v847 = vld [vmem:[#allocation7 + $0x38] sm:$0xf]
    %v848 = vld [vmem:[#allocation7 + $0x3c] sm:$0xf]
    %v849 = vld [vmem:[%s5 + $0x1] sm:$0x1]
    %v850 = vlaneseq
    %v851 = vshrl.u32 %v850, 7
    %v852 = vsub.s32 0, %v851
    %v853 = vrot.slane %v849, %v852
    %v870 = vunpack.c.l.b16 %v833
    %v871 = vunpack.c.l.b16 %v834
    %v872 = vunpack.c.l.b16 %v835
    %v873 = vunpack.c.l.b16 %v836
    %v874 = vunpack.c.l.b16 %v837
    %v875 = vunpack.c.l.b16 %v838
    %v876 = vunpack.c.l.b16 %v839
    %v877 = vunpack.c.l.b16 %v840
    %v878 = vunpack.c.l.b16 %v841
    %v879 = vunpack.c.l.b16 %v842
    %v880 = vunpack.c.l.b16 %v843
    %v881 = vunpack.c.l.b16 %v844
    %v882 = vunpack.c.l.b16 %v845
    %v883 = vunpack.c.l.b16 %v846
    %v884 = vunpack.c.l.b16 %v847
    %v885 = vunpack.c.l.b16 %v848
    %v886 = vpack.c.b16 %v871, %v870
    %v887 = vpack.c.b16 %v873, %v872
    %v888 = vpack.c.b16 %v875, %v874
    %v889 = vpack.c.b16 %v877, %v876
    %v890 = vpack.c.b16 %v879, %v878
    %v891 = vpack.c.b16 %v881, %v880
    %v892 = vpack.c.b16 %v883, %v882
    %v893 = vpack.c.b16 %v885, %v884
    %902 = vmatprep.subr.bf16.mxu0 0
    %903 = vmatpush1.bf16.msra.mxu0 %v886
    %904 = vmatprep.subr.bf16.mxu0 0
    %905 = vmatpush1.bf16.msra.mxu0 %v887
    %906 = vmatprep.subr.bf16.mxu0 0
    %907 = vmatpush1.bf16.msra.mxu0 %v888
    %908 = vmatprep.subr.bf16.mxu0 0
    %909 = vmatpush1.bf16.msra.mxu0 %v889
    %910 = vmatprep.subr.bf16.mxu0 0
    %911 = vmatpush1.bf16.msra.mxu0 %v890
    %912 = vmatprep.subr.bf16.mxu0 0
    %913 = vmatpush1.bf16.msra.mxu0 %v891
    %914 = vmatprep.subr.bf16.mxu0 0
    %915 = vmatpush1.bf16.msra.mxu0 %v892
    %916 = vmatprep.subr.bf16.mxu0 0
    %917 = vmatpush1.bf16.msra.mxu0 %v893
    %918 = vmatprep.subr.bf16.mxu0 0
    %919 = vmatpush1.bf16.msra.mxu0 0
    %920 = vmatprep.subr.bf16.mxu0 0
    %921 = vmatpush1.bf16.msra.mxu0 0
    %922 = vmatprep.subr.bf16.mxu0 0
    %923 = vmatpush1.bf16.msra.mxu0 0
    %924 = vmatprep.subr.bf16.mxu0 0
    %925 = vmatpush1.bf16.msra.mxu0 0
    %926 = vmatprep.subr.bf16.mxu0 0
    %927 = vmatpush1.bf16.msra.mxu0 0
    %928 = vmatprep.subr.bf16.mxu0 0
    %929 = vmatpush1.bf16.msra.mxu0 0
    %930 = vmatprep.subr.bf16.mxu0 0
    %931 = vmatpush1.bf16.msra.mxu0 0
    %932 = vmatprep.subr.bf16.mxu0 0
    %933 = vmatpush1.bf16.msra.mxu0 0
    %934 = vmatprep.mubr.bf16.mxu0 0
    %935 = vmatmul.mubr.bf16.gmra.mrb[0].mxu0 %v832
    %v936 = vpop.f32.mrb[0].mxu0
    %v937 = vadd.f32 %v853, %v936
    %v938 = vpop.f32.mrb[0].mxu0
    %v939 = vpop.f32.mrb[0].mxu0
    %v940 = vadd.f32 %v853, %v939
    %v941 = vpop.f32.mrb[0].mxu0
    %942 = vdwg.mxu0
    %v943 = vmax.f32 %v937, 0.0
    %v944 = vmax.f32 %v940, 0.0
    %945 = vst [vmem:[#allocation14] sm:$0xff] %v943
    %946 = vst [vmem:[#allocation14 + $0x8] sm:$0xff] %v944
    %v947 = vpack.c.bf16 %v944, %v943
    %v948 = vld [vmem:[#allocation8] sm:$0xf]
    %v949 = vld [vmem:[#allocation8 + $0x4] sm:$0xf]
    %v950 = vld [vmem:[#allocation8 + $0x8] sm:$0xf]
    %v951 = vld [vmem:[#allocation8 + $0xc] sm:$0xf]
    %v952 = vld [vmem:[#allocation8 + $0x10] sm:$0xf]
    %v953 = vld [vmem:[#allocation8 + $0x14] sm:$0xf]
    %v954 = vld [vmem:[#allocation8 + $0x18] sm:$0xf]
    %v955 = vld [vmem:[#allocation8 + $0x1c] sm:$0xf]
    %v956 = vld [vmem:[#allocation8 + $0x20] sm:$0xf]
    %v957 = vld [vmem:[#allocation8 + $0x24] sm:$0xf]
    %v958 = vld [vmem:[#allocation8 + $0x28] sm:$0xf]
    %v959 = vld [vmem:[#allocation8 + $0x2c] sm:$0xf]
    %v960 = vld [vmem:[#allocation8 + $0x30] sm:$0xf]
    %v961 = vld [vmem:[#allocation8 + $0x34] sm:$0xf]
    %v962 = vld [vmem:[#allocation8 + $0x38] sm:$0xf]
    %v963 = vld [vmem:[#allocation8 + $0x3c] sm:$0xf]
    %v964 = vld [vmem:[%s5 + $0x2] sm:$0x1]
    %v965 = vlaneseq
    %v966 = vshrl.u32 %v965, 7
    %v967 = vsub.s32 0, %v966
    %v968 = vrot.slane %v964, %v967
    %v985 = vunpack.c.l.b16 %v948
    %v986 = vunpack.c.l.b16 %v949
    %v987 = vunpack.c.l.b16 %v950
    %v988 = vunpack.c.l.b16 %v951
    %v989 = vunpack.c.l.b16 %v952
    %v990 = vunpack.c.l.b16 %v953
    %v991 = vunpack.c.l.b16 %v954
    %v992 = vunpack.c.l.b16 %v955
    %v993 = vunpack.c.l.b16 %v956
    %v994 = vunpack.c.l.b16 %v957
    %v995 = vunpack.c.l.b16 %v958
    %v996 = vunpack.c.l.b16 %v959
    %v997 = vunpack.c.l.b16 %v960
    %v998 = vunpack.c.l.b16 %v961
    %v999 = vunpack.c.l.b16 %v962
    %v1000 = vunpack.c.l.b16 %v963
    %v1001 = vpack.c.b16 %v986, %v985
    %v1002 = vpack.c.b16 %v988, %v987
    %v1003 = vpack.c.b16 %v990, %v989
    %v1004 = vpack.c.b16 %v992, %v991
    %v1005 = vpack.c.b16 %v994, %v993
    %v1006 = vpack.c.b16 %v996, %v995
    %v1007 = vpack.c.b16 %v998, %v997
    %v1008 = vpack.c.b16 %v1000, %v999
    %1017 = vmatprep.subr.bf16.mxu0 0
    %1018 = vmatpush1.bf16.msra.mxu0 %v1001
    %1019 = vmatprep.subr.bf16.mxu0 0
    %1020 = vmatpush1.bf16.msra.mxu0 %v1002
    %1021 = vmatprep.subr.bf16.mxu0 0
    %1022 = vmatpush1.bf16.msra.mxu0 %v1003
    %1023 = vmatprep.subr.bf16.mxu0 0
    %1024 = vmatpush1.bf16.msra.mxu0 %v1004
    %1025 = vmatprep.subr.bf16.mxu0 0
    %1026 = vmatpush1.bf16.msra.mxu0 %v1005
    %1027 = vmatprep.subr.bf16.mxu0 0
    %1028 = vmatpush1.bf16.msra.mxu0 %v1006
    %1029 = vmatprep.subr.bf16.mxu0 0
    %1030 = vmatpush1.bf16.msra.mxu0 %v1007
    %1031 = vmatprep.subr.bf16.mxu0 0
    %1032 = vmatpush1.bf16.msra.mxu0 %v1008
    %1033 = vmatprep.subr.bf16.mxu0 0
    %1034 = vmatpush1.bf16.msra.mxu0 0
    %1035 = vmatprep.subr.bf16.mxu0 0
    %1036 = vmatpush1.bf16.msra.mxu0 0
    %1037 = vmatprep.subr.bf16.mxu0 0
    %1038 = vmatpush1.bf16.msra.mxu0 0
    %1039 = vmatprep.subr.bf16.mxu0 0
    %1040 = vmatpush1.bf16.msra.mxu0 0
    %1041 = vmatprep.subr.bf16.mxu0 0
    %1042 = vmatpush1.bf16.msra.mxu0 0
    %1043 = vmatprep.subr.bf16.mxu0 0
    %1044 = vmatpush1.bf16.msra.mxu0 0
    %1045 = vmatprep.subr.bf16.mxu0 0
    %1046 = vmatpush1.bf16.msra.mxu0 0
    %1047 = vmatprep.subr.bf16.mxu0 0
    %1048 = vmatpush1.bf16.msra.mxu0 0
    %1049 = vmatprep.mubr.bf16.mxu0 0
    %1050 = vmatmul.mubr.bf16.gmra.mrb[0].mxu0 %v947
    %v1051 = vpop.f32.mrb[0].mxu0
    %v1052 = vadd.f32 %v968, %v1051
    %v1053 = vpop.f32.mrb[0].mxu0
    %v1054 = vpop.f32.mrb[0].mxu0
    %v1055 = vadd.f32 %v968, %v1054
    %v1056 = vpop.f32.mrb[0].mxu0
    %1057 = vdwg.mxu0
    %v1058 = vmax.f32 %v1052, 0.0
    %v1059 = vmax.f32 %v1055, 0.0
    %1060 = vst [vmem:[#allocation15] sm:$0xff] %v1058
    %1061 = vst [vmem:[#allocation15 + $0x8] sm:$0xff] %v1059
    %v1062 = vpack.c.bf16 %v1059, %v1058
    %v1063 = vld [vmem:[#allocation10] sm:$0xf]
    %v1064 = vld [vmem:[#allocation10 + $0x4] sm:$0xf]
    %v1065 = vld [vmem:[#allocation10 + $0x8] sm:$0xf]
    %v1066 = vld [vmem:[#allocation10 + $0xc] sm:$0xf]
    %v1067 = vld [vmem:[#allocation10 + $0x10] sm:$0xf]
    %v1068 = vld [vmem:[#allocation10 + $0x14] sm:$0xf]
    %v1069 = vld [vmem:[#allocation10 + $0x18] sm:$0xf]
    %v1070 = vld [vmem:[#allocation10 + $0x1c] sm:$0xf]
    %v1071 = vld [vmem:[#allocation10 + $0x20] sm:$0xf]
    %v1072 = vld [vmem:[#allocation10 + $0x24] sm:$0xf]
    %v1073 = vld [vmem:[#allocation10 + $0x28] sm:$0xf]
    %v1074 = vld [vmem:[#allocation10 + $0x2c] sm:$0xf]
    %v1075 = vld [vmem:[#allocation10 + $0x30] sm:$0xf]
    %v1076 = vld [vmem:[#allocation10 + $0x34] sm:$0xf]
    %v1077 = vld [vmem:[#allocation10 + $0x38] sm:$0xf]
    %v1078 = vld [vmem:[#allocation10 + $0x3c] sm:$0xf]
    %v1079 = vld [vmem:[%s5 + $0x3] sm:$0x1]
    %v1080 = vlaneseq
    %v1081 = vshrl.u32 %v1080, 7
    %v1082 = vsub.s32 0, %v1081
    %v1083 = vrot.slane %v1079, %v1082
    %v1100 = vunpack.c.l.b16 %v1063
    %v1101 = vunpack.c.l.b16 %v1064
    %v1102 = vunpack.c.l.b16 %v1065
    %v1103 = vunpack.c.l.b16 %v1066
    %v1104 = vunpack.c.l.b16 %v1067
    %v1105 = vunpack.c.l.b16 %v1068
    %v1106 = vunpack.c.l.b16 %v1069
    %v1107 = vunpack.c.l.b16 %v1070
    %v1108 = vunpack.c.l.b16 %v1071
    %v1109 = vunpack.c.l.b16 %v1072
    %v1110 = vunpack.c.l.b16 %v1073
    %v1111 = vunpack.c.l.b16 %v1074
    %v1112 = vunpack.c.l.b16 %v1075
    %v1113 = vunpack.c.l.b16 %v1076
    %v1114 = vunpack.c.l.b16 %v1077
    %v1115 = vunpack.c.l.b16 %v1078
    %v1116 = vpack.c.b16 %v1101, %v1100
    %v1117 = vpack.c.b16 %v1103, %v1102
    %v1118 = vpack.c.b16 %v1105, %v1104
    %v1119 = vpack.c.b16 %v1107, %v1106
    %v1120 = vpack.c.b16 %v1109, %v1108
    %v1121 = vpack.c.b16 %v1111, %v1110
    %v1122 = vpack.c.b16 %v1113, %v1112
    %v1123 = vpack.c.b16 %v1115, %v1114
    %1132 = vmatprep.subr.bf16.mxu0 0
    %1133 = vmatpush1.bf16.msra.mxu0 %v1116
    %1134 = vmatprep.subr.bf16.mxu0 0
    %1135 = vmatpush1.bf16.msra.mxu0 %v1117
    %1136 = vmatprep.subr.bf16.mxu0 0
    %1137 = vmatpush1.bf16.msra.mxu0 %v1118
    %1138 = vmatprep.subr.bf16.mxu0 0
    %1139 = vmatpush1.bf16.msra.mxu0 %v1119
    %1140 = vmatprep.subr.bf16.mxu0 0
    %1141 = vmatpush1.bf16.msra.mxu0 %v1120
    %1142 = vmatprep.subr.bf16.mxu0 0
    %1143 = vmatpush1.bf16.msra.mxu0 %v1121
    %1144 = vmatprep.subr.bf16.mxu0 0
    %1145 = vmatpush1.bf16.msra.mxu0 %v1122
    %1146 = vmatprep.subr.bf16.mxu0 0
    %1147 = vmatpush1.bf16.msra.mxu0 %v1123
    %1148 = vmatprep.subr.bf16.mxu0 0
    %1149 = vmatpush1.bf16.msra.mxu0 0
    %1150 = vmatprep.subr.bf16.mxu0 0
    %1151 = vmatpush1.bf16.msra.mxu0 0
    %1152 = vmatprep.subr.bf16.mxu0 0
    %1153 = vmatpush1.bf16.msra.mxu0 0
    %1154 = vmatprep.subr.bf16.mxu0 0
    %1155 = vmatpush1.bf16.msra.mxu0 0
    %1156 = vmatprep.subr.bf16.mxu0 0
    %1157 = vmatpush1.bf16.msra.mxu0 0
    %1158 = vmatprep.subr.bf16.mxu0 0
    %1159 = vmatpush1.bf16.msra.mxu0 0
    %1160 = vmatprep.subr.bf16.mxu0 0
    %1161 = vmatpush1.bf16.msra.mxu0 0
    %1162 = vmatprep.subr.bf16.mxu0 0
    %1163 = vmatpush1.bf16.msra.mxu0 0
    %1164 = vmatprep.mubr.bf16.mxu0 0
    %1165 = vmatmul.mubr.bf16.gmra.mrb[0].mxu0 %v1062
    %v1166 = vpop.f32.mrb[0].mxu0
    %v1167 = vadd.f32 %v1083, %v1166
    %v1168 = vpop.f32.mrb[0].mxu0
    %v1169 = vpop.f32.mrb[0].mxu0
    %v1170 = vadd.f32 %v1083, %v1169
    %v1171 = vpop.f32.mrb[0].mxu0
    %1172 = vdwg.mxu0
    %v1173 = vxor.u32 %v1167, 2147483648
    %v1174 = vxor.u32 %v1170, 2147483648
    %v1175 = vmul.f32 %v1173, 1.442695
    %v1176 = vpow.pop %v1175
    %v1177 = vmul.f32 %v1174, 1.442695
    %v1178 = vpow.pop %v1177
    %v1179 = vadd.f32 %v1176, 1.0
    %v1180 = vadd.f32 %v1178, 1.0
    %v1181 = vrcp.pop %v1179
    %v1182 = vmul.f32 1.0, %v1181
    %v1183 = vrcp.pop %v1180
    %v1184 = vmul.f32 1.0, %v1183
    %1185 = vst [vmem:[#allocation11] sm:$0xff] %v1182
    %1186 = vst [vmem:[#allocation11 + $0x8] sm:$0xff] %v1184
    // Predicated region
    $region46: #{tpu_custom_call.1} parent=1 // pred_check
      _
    $region47: #{tpu_custom_call.1} parent=1 // pred_check_branch
      %1188 = sbr.rel (0) target = $region49
    $region48: #{tpu_custom_call.1} parent=1 // pred_region
      %s1190 = ssub.s32 256, 256
      %1191 = vsyncadd [#allocation4], %s1190
      %s1192 = sshll.u32 [#allocation11], 4
      %s1193 = int_to_ptr.vmem [resolvable:$true] %s1192
      %1198 = dma.vmem_to_hbm [thread:$0]  %s1193, 256, %s6, [#allocation4], 128, 128, 8
    $region49: #{tpu_custom_call.1} parent=1 // pred_fallthru
      _
    // Predicated region
    $region50: #{tpu_custom_call.1} parent=1 // pred_check
      _
    $region51: #{tpu_custom_call.1} parent=1 // pred_check_branch
      %1200 = sbr.rel (0) target = $region53
    $region52: #{tpu_custom_call.1} parent=1 // pred_region
      %s1202 = ssub.s32 256, 256
      %1203 = vsyncadd [#allocation13], %s1202
      %s1204 = sshll.u32 [#allocation12], 4
      %s1205 = int_to_ptr.vmem [resolvable:$true] %s1204
      %1210 = dma.vmem_to_hbm [thread:$0]  %s1205, 256, %s7, [#allocation13], 128, 128, 8
    $region53: #{tpu_custom_call.1} parent=1 // pred_fallthru
      _
    // Predicated region
    $region54: #{tpu_custom_call.1} parent=1 // pred_check
      _
    $region55: #{tpu_custom_call.1} parent=1 // pred_check_branch
      %1212 = sbr.rel (0) target = $region57
    $region56: #{tpu_custom_call.1} parent=1 // pred_region
      %s1214 = ssub.s32 256, 256
      %1215 = vsyncadd [#allocation13], %s1214
      %s1216 = sshll.u32 [#allocation14], 4
      %s1217 = int_to_ptr.vmem [resolvable:$true] %s1216
      %1222 = dma.vmem_to_hbm [thread:$0]  %s1217, 256, %s8, [#allocation13], 128, 128, 8
    $region57: #{tpu_custom_call.1} parent=1 // pred_fallthru
      _
    // Predicated region
    $region58: #{tpu_custom_call.1} parent=1 // pred_check
      _
    $region59: #{tpu_custom_call.1} parent=1 // pred_check_branch
      %1224 = sbr.rel (0) target = $region61
    $region60: #{tpu_custom_call.1} parent=1 // pred_region
      %s1226 = ssub.s32 256, 256
      %1227 = vsyncadd [#allocation16], %s1226
      %s1228 = sshll.u32 [#allocation15], 4
      %s1229 = int_to_ptr.vmem [resolvable:$true] %s1228
      %1234 = dma.vmem_to_hbm [thread:$0]  %s1229, 256, %s9, [#allocation16], 128, 128, 8
    $region61: #{tpu_custom_call.1} parent=1 // pred_fallthru
      _
    // Predicated region
    $region62: #{tpu_custom_call.1} parent=1 // pred_check
      _
    $region63: #{tpu_custom_call.1} parent=1 // pred_check_branch
      %1236 = sbr.rel (0) target = $region65
    $region64: #{tpu_custom_call.1} parent=1 // pred_region
      %1237 = dma.done [#allocation4], 256
    $region65: #{tpu_custom_call.1} parent=1 // pred_fallthru
      _
    // Predicated region
    $region66: #{tpu_custom_call.1} parent=1 // pred_check
      _
    $region67: #{tpu_custom_call.1} parent=1 // pred_check_branch
      %1239 = sbr.rel (0) target = $region69
    $region68: #{tpu_custom_call.1} parent=1 // pred_region
      %1240 = dma.done [#allocation13], 256
    $region69: #{tpu_custom_call.1} parent=1 // pred_fallthru
      _
    // Predicated region
    $region70: #{tpu_custom_call.1} parent=1 // pred_check
      _
    $region71: #{tpu_custom_call.1} parent=1 // pred_check_branch
      %1242 = sbr.rel (0) target = $region73
    $region72: #{tpu_custom_call.1} parent=1 // pred_region
      %1243 = dma.done [#allocation13], 256
    $region73: #{tpu_custom_call.1} parent=1 // pred_fallthru
      _
    // Predicated region
    $region74: #{tpu_custom_call.1} parent=1 // pred_check
      _
    $region75: #{tpu_custom_call.1} parent=1 // pred_check_branch
      %1245 = sbr.rel (0) target = $region77
    $region76: #{tpu_custom_call.1} parent=1 // pred_region
      %1246 = dma.done [#allocation16], 256
    $region77: #{tpu_custom_call.1} parent=1 // pred_fallthru
      _
    %1247 = vsyncpa [#allocation3], 1
    %1248 = vsyncpa [#allocation6], 1
    %1249 = vsyncpa [#allocation9], 1
    %1250 = vsyncpa [#allocation4], 1
    %1251 = vsyncpa [#allocation13], 1
    %1252 = vsyncpa [#allocation16], 1

</llo_original>
